<compile_context>
chip_gen: v5e
topology: v5e:2x2
jax: 0.10.0
libtpu: 0.0.40
codegen_flags: <defaults>
</compile_context>

<pallas_src>
import functools

import jax
import jax.numpy as jnp
from jax.experimental import pallas as pl
from jax.experimental.pallas import tpu as pltpu


def _round_up(x, m):
    return (x + m - 1) // m * m


_VMEM_BUDGET = 24 << 20   # per-step scoped-VMEM target; safe on all generations


def _vmem_bytes_est(batch_tile, N, D, T_pad):
    """Rough per-step VMEM estimate used to cap batch_tile / set the limit."""
    rows = batch_tile * N
    return (2 * rows * D * 4            # x block (f32, double-buffered input)
            + rows * D * 2              # in-kernel bf16 cast of x
            + rows * D * 4              # pooler pre-activation / pooled (f32 worst case)
            + rows * T_pad * 4          # logits (f32)
            + 2 * rows * T_pad * 2      # local output (bf16, double-buffered)
            + 2 * batch_tile * T_pad * 2
            + batch_tile * rows * 2     # segment-mean mask (bf16, single-buffered)
            + (D * D + D * T_pad) * 2   # weights (bf16, single-buffered)
            + (D + T_pad) * 4)          # biases (f32)


def _use_bf16_eup():
    """bf16 tanh only on generations with a bf16 VPU/EUP (v6e, v7x)."""
    try:
        kind = jax.devices()[0].device_kind.lower()
    except Exception:
        return False
    return ("v6" in kind) or ("v7" in kind)


def sem_head_kernel(x_ref, wp_ref, bp_ref, wd_ref, bd_ref, s_ref,
                    local_ref, global_ref, *, inv_n, bf16_tanh):
    # x block: (batch_tile * N, D) — many batch elements' neighbor rows
    # flattened onto the sublane axis so the MXU sees one tall matmul.
    x = x_ref[...].astype(jnp.bfloat16)            # in-kernel cast (VPU filler)

    # lm_pooler: Linear(D, D) + Tanh.  bf16 MXU inputs, f32 accumulate.
    pre = (jnp.dot(x, wp_ref[...], preferred_element_type=jnp.float32)
           + bp_ref[...])                          # (rows, D) f32
    if bf16_tanh:
        pooled = jnp.tanh(pre.astype(jnp.bfloat16))        # bf16 EUP (v6e/v7x)
    else:
        pooled = jnp.tanh(pre).astype(jnp.bfloat16)        # f32 EUP (v5e-safe)

    # decoder on every (kg + et) neighbor row: Linear(D, T_pad).
    logits = (jnp.dot(pooled, wd_ref[...], preferred_element_type=jnp.float32)
              + bd_ref[...])                       # (rows, T_pad) f32

    local_ref[...] = jax.nn.sigmoid(logits).astype(local_ref.dtype)

    # global branch: decoder(mean_n pooled) == mean_n(pre-sigmoid logits)
    # because the decoder is affine.  s is a precomputed (tb, rows) 0/1 segment
    # mask (exact in bf16); scale by 1/N in f32 after the dot.
    g_logits = jnp.dot(s_ref[...], logits.astype(jnp.bfloat16),
                       preferred_element_type=jnp.float32) * inv_n
    # TODO(synk): MHA(5, 1.0) is an undefined class in the reference module;
    # it is treated as identity here, then the sigmoid is applied as in torch.
    global_ref[...] = jax.nn.sigmoid(g_logits).astype(global_ref.dtype)


def sem_head(x, wp, bp, wd, bd, *, batch_tile=None):
    """x: (bs, N, D) masked-token features (kg neighbors then et neighbors).

    Returns (local_predict (bs, N, T), global_predict (bs, 1, T)), both already
    passed through sigmoid, as float32.
    """
    bs, N, D = x.shape
    T = wd.shape[1]
    T_pad = _round_up(T, 128)          # lane-dense decoder outputs / stores

    if batch_tile is None:
        # >=512 matmul rows (= batch_tile * N) per grid step, multiple of 8.
        batch_tile = _round_up(max(1, -(-512 // N)), 8)
        batch_tile = min(batch_tile, _round_up(bs, 8))
        # v7x megacore: keep the grid >=2 steps when the batch allows it so the
        # "parallel" batch axis shards across both TensorCores.
        if bs >= 16:
            batch_tile = min(batch_tile, _round_up(pl.cdiv(bs, 2), 8))
        # Clamp to the per-step VMEM budget (v7x: 64 MiB physical).
        while batch_tile > 8 and _vmem_bytes_est(batch_tile, N, D, T_pad) > _VMEM_BUDGET:
            batch_tile -= 8
    bs_pad = _round_up(bs, batch_tile)
    grid = bs_pad // batch_tile
    rows_tile = batch_tile * N

    # Flatten (b, n) onto the sublane axis; pad the batch to the tile.
    # NOTE: no dtype cast here — x stays f32 in HBM and is cast to bf16
    # inside the kernel (saves one full wrapper-side HBM pass over x).
    x2 = x.reshape(bs * N, D)
    if bs_pad != bs:
        x2 = jnp.pad(x2, ((0, bs_pad * N - bs * N), (0, 0)))

    wp_c = wp.astype(jnp.bfloat16)                                # (D, D)
    bp_c = bp.astype(jnp.float32).reshape(1, D)                   # (1, D)
    wd_c = jnp.pad(wd, ((0, 0), (0, T_pad - T))).astype(jnp.bfloat16)  # (D, T_pad)
    bd_c = jnp.pad(bd.astype(jnp.float32).reshape(1, T),
                   ((0, 0), (0, T_pad - T)))                      # (1, T_pad)

    # Segment mask (ones within each batch element's N rows), built once.
    r = jnp.arange(rows_tile)[None, :]
    b = jnp.arange(batch_tile)[:, None]
    s_mask = ((r // N) == b).astype(jnp.bfloat16)                 # (tb, rows_tile)

    kernel = functools.partial(sem_head_kernel,
                               inv_n=float(1.0 / N),
                               bf16_tanh=_use_bf16_eup())

    vmem_est = _vmem_bytes_est(batch_tile, N, D, T_pad)
    vmem_limit = max(32 << 20, min(56 << 20, 2 * vmem_est))

    const = dict(pipeline_mode=pl.Buffered(1))   # fetched once: single-buffer

    local_p, global_p = pl.pallas_call(
        kernel,
        out_shape=(jax.ShapeDtypeStruct((bs_pad * N, T_pad), jnp.bfloat16),
                   jax.ShapeDtypeStruct((bs_pad, T_pad), jnp.bfloat16)),
        grid_spec=pltpu.PrefetchScalarGridSpec(
            num_scalar_prefetch=0,
            grid=(grid,),
            in_specs=[
                pl.BlockSpec((rows_tile, D), lambda i: (i, 0)),            # tokens
                pl.BlockSpec((D, D), lambda i: (0, 0), **const),           # pooler W
                pl.BlockSpec((1, D), lambda i: (0, 0), **const),           # pooler b
                pl.BlockSpec((D, T_pad), lambda i: (0, 0), **const),       # decoder W
                pl.BlockSpec((1, T_pad), lambda i: (0, 0), **const),       # decoder b
                pl.BlockSpec((batch_tile, rows_tile), lambda i: (0, 0), **const),  # seg mask
            ],
            out_specs=[
                pl.BlockSpec((rows_tile, T_pad), lambda i: (i, 0)),
                pl.BlockSpec((batch_tile, T_pad), lambda i: (i, 0)),
            ]),
        compiler_params=pltpu.CompilerParams(
            dimension_semantics=("parallel",),
            vmem_limit_bytes=int(vmem_limit)),
    )(x2, wp_c, bp_c, wd_c, bd_c, s_mask)

    # Slice off batch/type padding BEFORE anything downstream sees it
    # (padded type columns would otherwise read sigmoid(0) = 0.5).
    local = local_p[: bs * N, :T].reshape(bs, N, T).astype(jnp.float32)
    glob = global_p[:bs, :T].reshape(bs, 1, T).astype(jnp.float32)
    return local, glob


if __name__ == "__main__":
    # small synthetic shapes consistent with the forward pass
    bs, n_kg, n_et, seq, D, T = 2, 3, 2, 8, 32, 8
    keys = iter(jax.random.split(jax.random.PRNGKey(0), 10))

    # stand-ins for lm_encoder(...)['last_hidden_state'] (encoder itself is
    # untranslatable without pretrained weights)
    kg_hidden = jax.random.normal(next(keys), (bs * n_kg, seq, D), jnp.float32)
    et_hidden = jax.random.normal(next(keys), (bs * n_et, seq, D), jnp.float32)
    kg_mask_index = (jnp.arange(bs * n_kg),
                     jax.random.randint(next(keys), (bs * n_kg,), 0, seq))
    et_mask_index = (jnp.arange(bs * n_et),
                     jax.random.randint(next(keys), (bs * n_et,), 0, seq))

    # deterministic parameter init (shapes from __init__: pooler D->D, decoder D->T)
    wp = 0.05 * jax.random.normal(next(keys), (D, D), jnp.float32)
    bp = 0.05 * jax.random.normal(next(keys), (1, D), jnp.float32)
    wd = 0.05 * jax.random.normal(next(keys), (D, T), jnp.float32)
    bd = 0.05 * jax.random.normal(next(keys), (1, T), jnp.float32)

    # glue (plain JAX): masked-token gather + reshape(bs, n, D) + concat(kg, et)
    # TODO(synk): this gather could be fused into the kernel via
    # PrefetchScalarGridSpec(num_scalar_prefetch=2) + pl.Element row index maps.
    kg_masked = kg_hidden[kg_mask_index[0], kg_mask_index[1]]      # (bs*n_kg, D)
    et_masked = et_hidden[et_mask_index[0], et_mask_index[1]]      # (bs*n_et, D)
    x = jnp.concatenate([kg_masked.reshape(bs, n_kg, D),
                         et_masked.reshape(bs, n_et, D)], axis=1)  # (bs, N, D)

    local_pred, global_pred = sem_head(x, wp, bp, wd, bd)
    # predict = cat([kg_predict, et_predict, global_predict], dim=1).sigmoid()
    predict = jnp.concatenate([local_pred, global_pred], axis=1)   # (bs, N+1, T)
    jax.block_until_ready(predict)
    assert predict.shape == (bs, n_kg + n_et + 1, T)

    # plain-JAX f32 reference for the same head (bf16 dots / bf16 outputs => loose tol)
    pooled_r = jnp.tanh(x @ wp + bp)
    local_r = jax.nn.sigmoid(pooled_r @ wd + bd)
    global_r = jax.nn.sigmoid(pooled_r.mean(axis=1, keepdims=True) @ wd + bd)
    ref = jnp.concatenate([local_r, global_r], axis=1)
    err = jnp.max(jnp.abs(predict - ref))
    assert err < 2e-2, f"max abs error {err}"
    print("KERNEL_OK")
</pallas_src>

<mosaic_0001>
module attributes {stable_mosaic.version = 11 : i64} {
  func.func @sem_head_kernel(%arg0: i32, %arg1: memref<40x32xf32, #tpu.memory_space<vmem>>, %arg2: memref<32x32xbf16, #tpu.memory_space<vmem>>, %arg3: memref<1x32xf32, #tpu.memory_space<vmem>>, %arg4: memref<32x128xbf16, #tpu.memory_space<vmem>>, %arg5: memref<1x128xf32, #tpu.memory_space<vmem>>, %arg6: memref<8x40xbf16, #tpu.memory_space<vmem>>, %arg7: memref<40x128xbf16, #tpu.memory_space<vmem>>, %arg8: memref<8x128xbf16, #tpu.memory_space<vmem>>) attributes {dimension_semantics = [#tpu.dimension_semantics<parallel>], iteration_bounds = array<i64: 1>, scalar_prefetch = 0 : i64, scratch_operands = 0 : i64, tpu.core_type = #tpu.core_type<tc>, window_params = [{transform_indices = @transform_0, window_bounds = array<i64: 40, 32>}, {pipeline_mode = #tpu.pipeline_mode<synchronous>, transform_indices = @transform_1, window_bounds = array<i64: 32, 32>}, {pipeline_mode = #tpu.pipeline_mode<synchronous>, transform_indices = @transform_2, window_bounds = array<i64: 1, 32>}, {pipeline_mode = #tpu.pipeline_mode<synchronous>, transform_indices = @transform_3, window_bounds = array<i64: 32, 128>}, {pipeline_mode = #tpu.pipeline_mode<synchronous>, transform_indices = @transform_4, window_bounds = array<i64: 1, 128>}, {pipeline_mode = #tpu.pipeline_mode<synchronous>, transform_indices = @transform_5, window_bounds = array<i64: 8, 40>}, {transform_indices = @transform_6, window_bounds = array<i64: 40, 128>}, {transform_indices = @transform_7, window_bounds = array<i64: 8, 128>}]} {
    %c0 = arith.constant 0 : index
    %c0_0 = arith.constant 0 : index
    %0 = vector.load %arg1[%c0, %c0_0] : memref<40x32xf32, #tpu.memory_space<vmem>>, vector<40x32xf32>
    %1 = arith.truncf %0 : vector<40x32xf32> to vector<40x32xbf16>
    %c0_1 = arith.constant 0 : index
    %c0_2 = arith.constant 0 : index
    %2 = vector.load %arg2[%c0_1, %c0_2] : memref<32x32xbf16, #tpu.memory_space<vmem>>, vector<32x32xbf16>
    %cst = arith.constant dense<0.000000e+00> : vector<40x32xf32>
    %3 = tpu.matmul %1, %2, %cst {dimension_numbers = #tpu.dot_dimension_numbers<[1], [0], [0], [1], [0, 0, 1, 1], [], []>} : vector<40x32xbf16>, vector<32x32xbf16>, vector<40x32xf32> -> vector<40x32xf32>
    %c0_3 = arith.constant 0 : index
    %c0_4 = arith.constant 0 : index
    %4 = vector.load %arg3[%c0_3, %c0_4] : memref<1x32xf32, #tpu.memory_space<vmem>>, vector<1x32xf32>
    %5 = vector.broadcast %4 : vector<1x32xf32> to vector<40x32xf32>
    %6 = arith.addf %3, %5 : vector<40x32xf32>
    %7 = math.tanh %6 : vector<40x32xf32>
    %8 = arith.truncf %7 : vector<40x32xf32> to vector<40x32xbf16>
    %c0_5 = arith.constant 0 : index
    %c0_6 = arith.constant 0 : index
    %9 = vector.load %arg4[%c0_5, %c0_6] : memref<32x128xbf16, #tpu.memory_space<vmem>>, vector<32x128xbf16>
    %cst_7 = arith.constant dense<0.000000e+00> : vector<40x128xf32>
    %10 = tpu.matmul %8, %9, %cst_7 {dimension_numbers = #tpu.dot_dimension_numbers<[1], [0], [0], [1], [0, 0, 1, 1], [], []>} : vector<40x32xbf16>, vector<32x128xbf16>, vector<40x128xf32> -> vector<40x128xf32>
    %c0_8 = arith.constant 0 : index
    %c0_9 = arith.constant 0 : index
    %11 = vector.load %arg5[%c0_8, %c0_9] : memref<1x128xf32, #tpu.memory_space<vmem>>, vector<1x128xf32>
    %12 = vector.broadcast %11 : vector<1x128xf32> to vector<40x128xf32>
    %13 = arith.addf %10, %12 : vector<40x128xf32>
    %14 = arith.negf %13 : vector<40x128xf32>
    %15 = math.exp %14 : vector<40x128xf32>
    %cst_10 = arith.constant 1.000000e+00 : f32
    %16 = vector.broadcast %cst_10 : f32 to vector<40x128xf32>
    %17 = arith.addf %16, %15 : vector<40x128xf32>
    %18 = arith.divf %16, %17 : vector<40x128xf32>
    %19 = arith.truncf %18 : vector<40x128xf32> to vector<40x128xbf16>
    %c0_11 = arith.constant 0 : index
    %c0_12 = arith.constant 0 : index
    %20 = vector.load %arg7[%c0_11, %c0_12] : memref<40x128xbf16, #tpu.memory_space<vmem>>, vector<40x128xbf16>
    tpu.vector_store %arg7[%c0_11, %c0_12], %19 {strides = array<i32>} : memref<40x128xbf16, #tpu.memory_space<vmem>>, vector<40x128xbf16>,
    %c0_13 = arith.constant 0 : index
    %c0_14 = arith.constant 0 : index
    %21 = vector.load %arg6[%c0_13, %c0_14] : memref<8x40xbf16, #tpu.memory_space<vmem>>, vector<8x40xbf16>
    %22 = arith.truncf %13 : vector<40x128xf32> to vector<40x128xbf16>
    %cst_15 = arith.constant dense<0.000000e+00> : vector<8x128xf32>
    %23 = tpu.matmul %21, %22, %cst_15 {dimension_numbers = #tpu.dot_dimension_numbers<[1], [0], [0], [1], [0, 0, 1, 1], [], []>} : vector<8x40xbf16>, vector<40x128xbf16>, vector<8x128xf32> -> vector<8x128xf32>
    %cst_16 = arith.constant 2.000000e-01 : f32
    %24 = vector.broadcast %cst_16 : f32 to vector<8x128xf32>
    %25 = arith.mulf %23, %24 : vector<8x128xf32>
    %26 = arith.negf %25 : vector<8x128xf32>
    %27 = math.exp %26 : vector<8x128xf32>
    %cst_17 = arith.constant 1.000000e+00 : f32
    %28 = vector.broadcast %cst_17 : f32 to vector<8x128xf32>
    %29 = arith.addf %28, %27 : vector<8x128xf32>
    %30 = arith.divf %28, %29 : vector<8x128xf32>
    %31 = arith.truncf %30 : vector<8x128xf32> to vector<8x128xbf16>
    %c0_18 = arith.constant 0 : index
    %c0_19 = arith.constant 0 : index
    %32 = vector.load %arg8[%c0_18, %c0_19] : memref<8x128xbf16, #tpu.memory_space<vmem>>, vector<8x128xbf16>
    tpu.vector_store %arg8[%c0_18, %c0_19], %31 {strides = array<i32>} : memref<8x128xbf16, #tpu.memory_space<vmem>>, vector<8x128xbf16>,
    return
  }
  func.func @transform_0(%arg0: i32) -> (i32, i32) {
    %c0_i32 = arith.constant 0 : i32
    %c0_i32_0 = arith.constant 0 : i32
    return %arg0, %c0_i32 : i32, i32
  }
  func.func @transform_1(%arg0: i32) -> (i32, i32) {
    %c0_i32 = arith.constant 0 : i32
    %c0_i32_0 = arith.constant 0 : i32
    %c0_i32_1 = arith.constant 0 : i32
    return %c0_i32, %c0_i32_0 : i32, i32
  }
  func.func @transform_2(%arg0: i32) -> (i32, i32) {
    %c0_i32 = arith.constant 0 : i32
    %c0_i32_0 = arith.constant 0 : i32
    %c0_i32_1 = arith.constant 0 : i32
    return %c0_i32, %c0_i32_0 : i32, i32
  }
  func.func @transform_3(%arg0: i32) -> (i32, i32) {
    %c0_i32 = arith.constant 0 : i32
    %c0_i32_0 = arith.constant 0 : i32
    %c0_i32_1 = arith.constant 0 : i32
    return %c0_i32, %c0_i32_0 : i32, i32
  }
  func.func @transform_4(%arg0: i32) -> (i32, i32) {
    %c0_i32 = arith.constant 0 : i32
    %c0_i32_0 = arith.constant 0 : i32
    %c0_i32_1 = arith.constant 0 : i32
    return %c0_i32, %c0_i32_0 : i32, i32
  }
  func.func @transform_5(%arg0: i32) -> (i32, i32) {
    %c0_i32 = arith.constant 0 : i32
    %c0_i32_0 = arith.constant 0 : i32
    %c0_i32_1 = arith.constant 0 : i32
    return %c0_i32, %c0_i32_0 : i32, i32
  }
  func.func @transform_6(%arg0: i32) -> (i32, i32) {
    %c0_i32 = arith.constant 0 : i32
    %c0_i32_0 = arith.constant 0 : i32
    return %arg0, %c0_i32 : i32, i32
  }
  func.func @transform_7(%arg0: i32) -> (i32, i32) {
    %c0_i32 = arith.constant 0 : i32
    %c0_i32_0 = arith.constant 0 : i32
    return %arg0, %c0_i32 : i32, i32
  }
}

</mosaic_0001>

<llo_original>
// kernel: tpu_custom_call.1
$region0: #{tpu_custom_call.1}
  #allocation0 [shape = 'u32[]', space=smem, size = 0x4, offset = 0x4, fixed_abs, tag = 'smem constant byte address 0x4 - core index']
  #allocation1 [shape = 'u32[72,128]{1,0:T(1,128)}', space=vmem, size = 0x9000, scoped, tag = 'internal scratch']
  %s0 = inlined_call_operand.vmem [shape: f32[40,32], index: 0, kind: input, shape index: {}]
  %s1 = inlined_call_operand.vmem [shape: bf16[32,32], index: 1, kind: input, shape index: {}]
  %s2 = inlined_call_operand.vmem [shape: f32[1,32], index: 2, kind: input, shape index: {}]
  %s3 = inlined_call_operand.vmem [shape: bf16[32,128], index: 3, kind: input, shape index: {}]
  %s4 = inlined_call_operand.vmem [shape: f32[1,128], index: 4, kind: input, shape index: {}]
  %s5 = inlined_call_operand.vmem [shape: bf16[8,40], index: 5, kind: input, shape index: {}]
  %s6 = inlined_call_operand.hbm [shape: bf16[40,128], index: 6, kind: output, shape index: {0}]
  %s7 = inlined_call_operand.hbm [shape: bf16[8,128], index: 7, kind: output, shape index: {1}]
  %8 = xla_tuple %s6, %s7
  %s9 = sld [smem:[#allocation0]]
  $region42: #{tpu_custom_call.1} parent=0
    _
  %s11 = ssub.s32 1, %s9
  %s12 = scalar_select 0, %s11, %s9
  $region1: #{tpu_custom_call.1} parent=0
    #allocation2 [shape = 'u8[10240]{0}', space=vmem, size = 0x2800, scoped, tag = 'output window, operand 0, single buffered']
    #allocation3 [shape = 's32[1]{0}', space=sflag, size = 0x4, scoped, tag = 'scoped memory for tpu_custom_call.1']
    #allocation4 [shape = 'u8[2048]{0}', space=vmem, size = 0x800, scoped, tag = 'output window, operand 1, single buffered']
    #allocation5 [shape = 's32[1]{0}', space=sflag, size = 0x4, scoped, tag = 'scoped memory for tpu_custom_call.1']
    %13 = vsyncpa [#allocation3], 0
    %14 = vsyncpa [#allocation5], 0
    // Predicated region
    $region2: #{tpu_custom_call.1} parent=1 // pred_check
      _
    $region3: #{tpu_custom_call.1} parent=1 // pred_check_branch
      %16 = sbr.rel (0) target = $region5
    $region4: #{tpu_custom_call.1} parent=1 // pred_region
      _
    $region5: #{tpu_custom_call.1} parent=1 // pred_fallthru
      _
    // Predicated region
    $region6: #{tpu_custom_call.1} parent=1 // pred_check
      _
    $region7: #{tpu_custom_call.1} parent=1 // pred_check_branch
      %18 = sbr.rel (0) target = $region9
    $region8: #{tpu_custom_call.1} parent=1 // pred_region
      _
    $region9: #{tpu_custom_call.1} parent=1 // pred_fallthru
      _
    // Predicated region
    $region10: #{tpu_custom_call.1} parent=1 // pred_check
      _
    $region11: #{tpu_custom_call.1} parent=1 // pred_check_branch
      %20 = sbr.rel (0) target = $region13
    $region12: #{tpu_custom_call.1} parent=1 // pred_region
      _
    $region13: #{tpu_custom_call.1} parent=1 // pred_fallthru
      _
    // Predicated region
    $region14: #{tpu_custom_call.1} parent=1 // pred_check
      _
    $region15: #{tpu_custom_call.1} parent=1 // pred_check_branch
      %22 = sbr.rel (0) target = $region17
    $region16: #{tpu_custom_call.1} parent=1 // pred_region
      _
    $region17: #{tpu_custom_call.1} parent=1 // pred_fallthru
      _
    // Predicated region
    $region18: #{tpu_custom_call.1} parent=1 // pred_check
      _
    $region19: #{tpu_custom_call.1} parent=1 // pred_check_branch
      %24 = sbr.rel (0) target = $region21
    $region20: #{tpu_custom_call.1} parent=1 // pred_region
      _
    $region21: #{tpu_custom_call.1} parent=1 // pred_fallthru
      _
    // Predicated region
    $region22: #{tpu_custom_call.1} parent=1 // pred_check
      _
    $region23: #{tpu_custom_call.1} parent=1 // pred_check_branch
      %26 = sbr.rel (0) target = $region25
    $region24: #{tpu_custom_call.1} parent=1 // pred_region
      _
    $region25: #{tpu_custom_call.1} parent=1 // pred_fallthru
      _
    %v28 = vld [vmem:[%s0] sm:$0xff]
    %v29 = vld [vmem:[%s0 + $0x8] sm:$0xff]
    %v30 = vld [vmem:[%s0 + $0x10] sm:$0xff]
    %v31 = vld [vmem:[%s0 + $0x18] sm:$0xff]
    %v32 = vld [vmem:[%s0 + $0x20] sm:$0xff]
    %v33 = vpack.c.bf16 %v29, %v28
    %v34 = vpack.c.bf16 %v31, %v30
    %v35 = vpack.c.bf16 %v32, %v32
    %v36 = vld [vmem:[%s1] sm:$0xf]
    %v37 = vld [vmem:[%s1 + $0x4] sm:$0xf]
    %v38 = vld [vmem:[%s1 + $0x8] sm:$0xf]
    %v39 = vld [vmem:[%s1 + $0xc] sm:$0xf]
    %v40 = vld [vmem:[%s2] sm:$0x1]
    %v42 = vperm.slane %v40, 0
    %v48 = vunpack.c.l.b16 %v36
    %v49 = vunpack.c.l.b16 %v37
    %v50 = vunpack.c.l.b16 %v38
    %v51 = vunpack.c.l.b16 %v39
    %v52 = vpack.c.b16 %v49, %v48
    %v53 = vpack.c.b16 %v51, %v50
    %vm56 = vcmask 261120
    %v58 = vsel %vm56, %v33, 0
    %v61 = vsel %vm56, %v34, 0
    %v64 = vsel %vm56, %v35, 0
    %66 = vmatpush.bf16.msra.mxu0 0
    %67 = vmatpush.bf16.msra.mxu0 0
    %68 = vmatpush.bf16.msra.mxu0 0
    %69 = vmatpush.bf16.msra.mxu0 0
    %70 = vmatpush.bf16.msra.mxu0 0
    %71 = vmatpush.bf16.msra.mxu0 0
    %72 = vmatpush.bf16.msra.mxu0 %v53
    %73 = vmatpush.bf16.msra.mxu0 %v52
    %74 = vmatmul.bf16.gmra.mxu0 %v58
    %v75 = vpop.f32.mrf.mxu0
    %v76 = vadd.f32 %v42, %v75
    %v77 = vpop.f32.mrf.mxu0
    %v78 = vadd.f32 %v42, %v77
    %79 = vmatmul.bf16.gmra.mxu0 %v61
    %v80 = vpop.f32.mrf.mxu0
    %v81 = vadd.f32 %v42, %v80
    %v82 = vpop.f32.mrf.mxu0
    %v83 = vadd.f32 %v42, %v82
    %84 = vmatmul.bf16.gmra.mxu0 %v64
    %v85 = vpop.f32.mrf.mxu0
    %v86 = vadd.f32 %v42, %v85
    %v87 = vpop.f32.mrf.mxu0
    %88 = vdwg.mxu0
    %v89 = vtanh.pop %v76
    %v90 = vtanh.pop %v78
    %v91 = vtanh.pop %v81
    %v92 = vtanh.pop %v83
    %v93 = vtanh.pop %v86
    %v94 = vpack.c.bf16 %v90, %v89
    %v95 = vpack.c.bf16 %v92, %v91
    %v96 = vpack.c.bf16 %v93, %v93
    %v97 = vld [vmem:[%s3] sm:$0xf]
    %v98 = vld [vmem:[%s3 + $0x4] sm:$0xf]
    %v99 = vld [vmem:[%s3 + $0x8] sm:$0xf]
    %v100 = vld [vmem:[%s3 + $0xc] sm:$0xf]
    %v101 = vld [vmem:[%s4] sm:$0x1]
    %v103 = vperm.slane %v101, 0
    %v109 = vunpack.c.l.b16 %v97
    %v110 = vunpack.c.l.b16 %v98
    %v111 = vunpack.c.l.b16 %v99
    %v112 = vunpack.c.l.b16 %v100
    %v113 = vpack.c.b16 %v110, %v109
    %v114 = vpack.c.b16 %v112, %v111
    %v118 = vsel %vm56, %v94, 0
    %v121 = vsel %vm56, %v95, 0
    %v124 = vsel %vm56, %v96, 0
    %126 = vmatpush.bf16.msra.mxu0 0
    %127 = vmatpush.bf16.msra.mxu0 0
    %128 = vmatpush.bf16.msra.mxu0 0
    %129 = vmatpush.bf16.msra.mxu0 0
    %130 = vmatpush.bf16.msra.mxu0 0
    %131 = vmatpush.bf16.msra.mxu0 0
    %132 = vmatpush.bf16.msra.mxu0 %v114
    %133 = vmatpush.bf16.msra.mxu0 %v113
    %134 = vmatmul.bf16.gmra.mxu0 %v118
    %v135 = vpop.f32.mrf.mxu0
    %v136 = vadd.f32 %v103, %v135
    %v137 = vpop.f32.mrf.mxu0
    %v138 = vadd.f32 %v103, %v137
    %139 = vmatmul.bf16.gmra.mxu0 %v121
    %v140 = vpop.f32.mrf.mxu0
    %v141 = vadd.f32 %v103, %v140
    %v142 = vpop.f32.mrf.mxu0
    %v143 = vadd.f32 %v103, %v142
    %144 = vmatmul.bf16.gmra.mxu0 %v124
    %v145 = vpop.f32.mrf.mxu0
    %v146 = vadd.f32 %v103, %v145
    %v147 = vpop.f32.mrf.mxu0
    %148 = vdwg.mxu0
    %v149 = vxor.u32 %v136, 2147483648
    %v150 = vxor.u32 %v138, 2147483648
    %v151 = vxor.u32 %v141, 2147483648
    %v152 = vxor.u32 %v143, 2147483648
    %v153 = vxor.u32 %v146, 2147483648
    %v154 = vmul.f32 %v149, 1.442695
    %v155 = vpow.pop %v154
    %v156 = vmul.f32 %v150, 1.442695
    %v157 = vpow.pop %v156
    %v158 = vmul.f32 %v151, 1.442695
    %v159 = vpow.pop %v158
    %v160 = vmul.f32 %v152, 1.442695
    %v161 = vpow.pop %v160
    %v162 = vmul.f32 %v153, 1.442695
    %v163 = vpow.pop %v162
    %v164 = vadd.f32 %v155, 1.0
    %v165 = vadd.f32 %v157, 1.0
    %v166 = vadd.f32 %v159, 1.0
    %v167 = vadd.f32 %v161, 1.0
    %v168 = vadd.f32 %v163, 1.0
    %v169 = vrcp.pop %v164
    %v170 = vmul.f32 %v164, %v169
    %v171 = vsub.f32 1.0, %v170
    %v172 = vmul.f32 %v169, %v171
    %v173 = vadd.f32 %v169, %v172
    %vm174 = vweird.f32 %v164
    %vm175 = vweird.f32 %v169
    %vm176 = vmor %vm174, %vm175
    %v177 = vsel %vm176, %v169, %v173
    %v178 = vand.u32 2147483647, %v164
    %vm179 = vcmp.eq.f32.partialorder %v178, 8.507059e+37
    %v180 = vand.u32 %v164, 2147483648
    %v181 = vor.u32 1.1754944e-38, %v180
    %v182 = vsel %vm179, %v181, %v177
    %v183 = vmul.f32 1.0, %v182
    %v184 = vrcp.pop %v165
    %v185 = vmul.f32 %v165, %v184
    %v186 = vsub.f32 1.0, %v185
    %v187 = vmul.f32 %v184, %v186
    %v188 = vadd.f32 %v184, %v187
    %vm189 = vweird.f32 %v165
    %vm190 = vweird.f32 %v184
    %vm191 = vmor %vm189, %vm190
    %v192 = vsel %vm191, %v184, %v188
    %v193 = vand.u32 2147483647, %v165
    %vm194 = vcmp.eq.f32.partialorder %v193, 8.507059e+37
    %v195 = vand.u32 %v165, 2147483648
    %v196 = vor.u32 1.1754944e-38, %v195
    %v197 = vsel %vm194, %v196, %v192
    %v198 = vmul.f32 1.0, %v197
    %v199 = vrcp.pop %v166
    %v200 = vmul.f32 %v166, %v199
    %v201 = vsub.f32 1.0, %v200
    %v202 = vmul.f32 %v199, %v201
    %v203 = vadd.f32 %v199, %v202
    %vm204 = vweird.f32 %v166
    %vm205 = vweird.f32 %v199
    %vm206 = vmor %vm204, %vm205
    %v207 = vsel %vm206, %v199, %v203
    %v208 = vand.u32 2147483647, %v166
    %vm209 = vcmp.eq.f32.partialorder %v208, 8.507059e+37
    %v210 = vand.u32 %v166, 2147483648
    %v211 = vor.u32 1.1754944e-38, %v210
    %v212 = vsel %vm209, %v211, %v207
    %v213 = vmul.f32 1.0, %v212
    %v214 = vrcp.pop %v167
    %v215 = vmul.f32 %v167, %v214
    %v216 = vsub.f32 1.0, %v215
    %v217 = vmul.f32 %v214, %v216
    %v218 = vadd.f32 %v214, %v217
    %vm219 = vweird.f32 %v167
    %vm220 = vweird.f32 %v214
    %vm221 = vmor %vm219, %vm220
    %v222 = vsel %vm221, %v214, %v218
    %v223 = vand.u32 2147483647, %v167
    %vm224 = vcmp.eq.f32.partialorder %v223, 8.507059e+37
    %v225 = vand.u32 %v167, 2147483648
    %v226 = vor.u32 1.1754944e-38, %v225
    %v227 = vsel %vm224, %v226, %v222
    %v228 = vmul.f32 1.0, %v227
    %v229 = vrcp.pop %v168
    %v230 = vmul.f32 %v168, %v229
    %v231 = vsub.f32 1.0, %v230
    %v232 = vmul.f32 %v229, %v231
    %v233 = vadd.f32 %v229, %v232
    %vm234 = vweird.f32 %v168
    %vm235 = vweird.f32 %v229
    %vm236 = vmor %vm234, %vm235
    %v237 = vsel %vm236, %v229, %v233
    %v238 = vand.u32 2147483647, %v168
    %vm239 = vcmp.eq.f32.partialorder %v238, 8.507059e+37
    %v240 = vand.u32 %v168, 2147483648
    %v241 = vor.u32 1.1754944e-38, %v240
    %v242 = vsel %vm239, %v241, %v237
    %v243 = vmul.f32 1.0, %v242
    %v244 = vpack.c.bf16 %v183, %v183
    %v245 = vpack.c.bf16 %v198, %v198
    %v246 = vpack.c.bf16 %v213, %v213
    %v247 = vpack.c.bf16 %v228, %v228
    %v248 = vpack.c.bf16 %v243, %v243
    %249 = vst [vmem:[#allocation2] sm:$0xf] %v244
    %250 = vst [vmem:[#allocation2 + $0x4] sm:$0xf] %v245
    %251 = vst [vmem:[#allocation2 + $0x8] sm:$0xf] %v246
    %252 = vst [vmem:[#allocation2 + $0xc] sm:$0xf] %v247
    %253 = vst [vmem:[#allocation2 + $0x10] sm:$0xf] %v248
    %v254 = vld [vmem:[%s5] sm:$0xf]
    %v255 = vpack.c.bf16 %v138, %v136
    %v256 = vpack.c.bf16 %v143, %v141
    %v257 = vpack.c.bf16 %v146, %v146
    %vm258 = vcmask 326656
    %v260 = vsel %vm258, %v254, 0
    %vm262 = vcmask 1043456
    %v264 = vsel %vm262, %v257, 0
    %266 = vmatpush.bf16.msra.mxu0 0
    %267 = vmatpush.bf16.msra.mxu0 0
    %268 = vmatpush.bf16.msra.mxu0 0
    %269 = vmatpush.bf16.msra.mxu0 0
    %270 = vmatpush.bf16.msra.mxu0 0
    %271 = vmatpush.bf16.msra.mxu0 %v264
    %272 = vmatpush.bf16.msra.mxu0 %v256
    %273 = vmatpush.bf16.msra.mxu0 %v255
    %274 = vmatmul.bf16.gmra.mxu0 %v260
    %v275 = vpop.f32.mrf.mxu0
    %v276 = vadd.f32 0.0, %v275
    %v277 = vpop.f32.mrf.mxu0
    %278 = vdwg.mxu0
    %v279 = vmul.f32 %v276, 0.2
    %v280 = vxor.u32 %v279, 2147483648
    %v281 = vmul.f32 %v280, 1.442695
    %v282 = vpow.pop %v281
    %v283 = vadd.f32 %v282, 1.0
    %v284 = vrcp.pop %v283
    %v285 = vmul.f32 %v283, %v284
    %v286 = vsub.f32 1.0, %v285
    %v287 = vmul.f32 %v284, %v286
    %v288 = vadd.f32 %v284, %v287
    %vm289 = vweird.f32 %v283
    %vm290 = vweird.f32 %v284
    %vm291 = vmor %vm289, %vm290
    %v292 = vsel %vm291, %v284, %v288
    %v293 = vand.u32 2147483647, %v283
    %vm294 = vcmp.eq.f32.partialorder %v293, 8.507059e+37
    %v295 = vand.u32 %v283, 2147483648
    %v296 = vor.u32 1.1754944e-38, %v295
    %v297 = vsel %vm294, %v296, %v292
    %v298 = vmul.f32 1.0, %v297
    %v299 = vpack.c.bf16 %v298, %v298
    %300 = vst [vmem:[#allocation4] sm:$0xf] %v299
    // Predicated region
    $region26: #{tpu_custom_call.1} parent=1 // pred_check
      _
    $region27: #{tpu_custom_call.1} parent=1 // pred_check_branch
      %302 = sbr.rel (0) target = $region29
    $region28: #{tpu_custom_call.1} parent=1 // pred_region
      %304 = vsyncadd [#allocation3], 0
      %s305 = sshll.u32 [#allocation2], 4
      %s306 = int_to_ptr.vmem [resolvable:$true] %s305
      %s307 = sshll.u32 %s6, 4
      %s308 = int_to_ptr.hbm [resolvable:$true] %s307
      %313 = dma.vmem_to_hbm [thread:$0]  %s306, 320, %s308, [#allocation3], 64, 64, 4
    $region29: #{tpu_custom_call.1} parent=1 // pred_fallthru
      _
    // Predicated region
    $region30: #{tpu_custom_call.1} parent=1 // pred_check
      _
    $region31: #{tpu_custom_call.1} parent=1 // pred_check_branch
      %315 = sbr.rel (0) target = $region33
    $region32: #{tpu_custom_call.1} parent=1 // pred_region
      %317 = vsyncadd [#allocation5], 0
      %s319 = sshll.u32 [#allocation4], 4
      %s320 = int_to_ptr.vmem [resolvable:$true] %s319
      %s321 = sshll.u32 %s7, 4
      %s322 = int_to_ptr.hbm [resolvable:$true] %s321
      %324 = dma.vmem_to_hbm [thread:$0]  %s320, 64, %s322, [#allocation5]
    $region33: #{tpu_custom_call.1} parent=1 // pred_fallthru
      _
    // Predicated region
    $region34: #{tpu_custom_call.1} parent=1 // pred_check
      _
    $region35: #{tpu_custom_call.1} parent=1 // pred_check_branch
      %326 = sbr.rel (0) target = $region37
    $region36: #{tpu_custom_call.1} parent=1 // pred_region
      %328 = dma.done [#allocation3], 320
    $region37: #{tpu_custom_call.1} parent=1 // pred_fallthru
      _
    // Predicated region
    $region38: #{tpu_custom_call.1} parent=1 // pred_check
      _
    $region39: #{tpu_custom_call.1} parent=1 // pred_check_branch
      %330 = sbr.rel (0) target = $region41
    $region40: #{tpu_custom_call.1} parent=1 // pred_region
      %332 = dma.done [#allocation5], 64
    $region41: #{tpu_custom_call.1} parent=1 // pred_fallthru
      _
    %333 = vsyncpa [#allocation3], 1
    %334 = vsyncpa [#allocation5], 1

</llo_original>
